<compile_context>
chip_gen: v7x
topology: tpu7x:2x2x1
jax: 0.10.0
libtpu: 0.0.40
codegen_flags: <defaults>
</compile_context>

<pallas_src>
import jax
import jax.numpy as jnp
from jax import lax
from jax.experimental import pallas as pl
from jax.experimental.pallas import tpu as pltpu


def _round_up(x, m):
    return (x + m - 1) // m * m


def _log_sigmoid(x):
    # numerically stable log(sigmoid(x)) = min(x, 0) - log1p(exp(-|x|))
    return jnp.minimum(x, 0.0) - jnp.log1p(jnp.exp(-jnp.abs(x)))


def _make_skipgram_kernel(*, TB, B, Bp):
    needs_mask = Bp != B

    def kernel(eu_ref, ev_ref, en_ref, out_ref):
        i = pl.program_id(0)

        eu = eu_ref[...].astype(jnp.float32)              # (TB, Dp)
        ev = ev_ref[...].astype(jnp.float32)              # (TB, Dp)
        en = en_ref[...].astype(jnp.float32)              # (TB, Dp) = sum_k eneg_k

        pos_score = jnp.sum(eu * ev, axis=-1, keepdims=True)   # (TB, 1)
        neg_score = jnp.sum(eu * en, axis=-1, keepdims=True)   # (TB, 1)
        per_row = _log_sigmoid(pos_score) + _log_sigmoid(-neg_score)

        if needs_mask:  # static branch: zero contributions of padded rows
            row_ids = i * TB + lax.broadcasted_iota(jnp.int32, (TB, 1), 0)
            per_row = jnp.where(row_ids < B, per_row, 0.0)

        tile_sum = jnp.sum(per_row)                        # scalar partial sum
        # Lane-dense, (8,128)-aligned partial-sum block; only [0,0,0] is read.
        out_ref[...] = jnp.broadcast_to(tile_sum, out_ref.shape).astype(
            out_ref.dtype)

    return kernel


def skipgram_loss(u_weights, v_weights, u_pos, v_pos, v_neg, *, tb=512):
    """-mean_b[ logsigmoid(u.v_pos) + logsigmoid(-sum_k u.v_neg_k) ]."""
    _, D = u_weights.shape
    B = int(u_pos.shape[0])

    # Data-dependent embedding gathers stay as glue JAX (XLA fuses gather+sum);
    # the kernel consumes dense, pre-reduced (B, D) streams.
    embed_u = jnp.take(u_weights, u_pos, axis=0)                       # (B, D)
    embed_v = jnp.take(v_weights, v_pos, axis=0)                       # (B, D)
    eneg_sum = jnp.take(v_weights, v_neg, axis=0).sum(axis=1)          # (B, D)

    # Tile geometry: sublane-aligned batch tiles, lane-padded embedding dim.
    TB = _round_up(max(8, min(int(tb), B)), 8)
    Bp = _round_up(B, TB)
    num_tiles = Bp // TB
    Dp = _round_up(D, 128)

    def _pad(x):
        return jnp.pad(x, ((0, Bp - B), (0, Dp - D)))

    eu = _pad(embed_u)
    ev = _pad(embed_v)
    en = _pad(eneg_sum)

    kernel = _make_skipgram_kernel(TB=TB, B=B, Bp=Bp)

    # VMEM budget: 3 inputs x 2 pipeline buffers x (TB, Dp) f32 tiles + output.
    tile_bytes = TB * Dp * jnp.dtype(eu.dtype).itemsize
    vmem_need = 3 * 2 * tile_bytes + 8 * 128 * 4 + (1 << 20)
    vmem_limit = int(min(max(2 * vmem_need, 16 * 2**20), 48 * 2**20))

    partials = pl.pallas_call(
        kernel,
        out_shape=jax.ShapeDtypeStruct((num_tiles, 8, 128), jnp.float32),
        grid=(num_tiles,),
        in_specs=[
            pl.BlockSpec((TB, Dp), lambda i: (i, 0)),   # embed_u tile
            pl.BlockSpec((TB, Dp), lambda i: (i, 0)),   # embed_v tile
            pl.BlockSpec((TB, Dp), lambda i: (i, 0)),   # eneg_sum tile
        ],
        out_specs=pl.BlockSpec((1, 8, 128), lambda i: (i, 0, 0)),
        compiler_params=pltpu.CompilerParams(
            # Tiles are independent: megacore (v7x) may shard the batch axis.
            dimension_semantics=("parallel",),
            vmem_limit_bytes=vmem_limit,
        ),
    )(eu, ev, en)

    total = jnp.sum(partials[:, 0, 0])
    return -(total / jnp.float32(B))


def _skipgram_loss_ref(u_weights, v_weights, u_pos, v_pos, v_neg):
    # pure-JAX reference mirroring the torch forward
    eu = jnp.take(u_weights, u_pos, axis=0)
    ev = jnp.take(v_weights, v_pos, axis=0)
    eneg = jnp.take(v_weights, v_neg, axis=0)
    pos = jax.nn.log_sigmoid(jnp.sum(eu * ev, axis=1))
    neg = jax.nn.log_sigmoid(-jnp.sum(jnp.einsum("bkd,bd->bk", eneg, eu), axis=1))
    return -jnp.mean(pos + neg)


if __name__ == "__main__":
    vocab_size = 64
    embed_dim = 32
    batch = 20          # deliberately not a multiple of the tile size
    n_neg = 8

    key = jax.random.PRNGKey(0)
    k_u, k_v, k_up, k_vp, k_vn = jax.random.split(key, 5)

    # u_embeddings ~ U(-0.5/D, 0.5/D) as in skipgram.__init__.  The module
    # zero-initializes v_embeddings; random values here so the negative-sample
    # reduction path is actually exercised by the check.
    initrange = 0.5 / embed_dim
    u_weights = jax.random.uniform(
        k_u, (vocab_size, embed_dim), jnp.float32, minval=-initrange, maxval=initrange
    )
    v_weights = jax.random.uniform(
        k_v, (vocab_size, embed_dim), jnp.float32, minval=-0.5, maxval=0.5
    )

    u_pos = jax.random.randint(k_up, (batch,), 0, vocab_size, dtype=jnp.int32)
    v_pos = jax.random.randint(k_vp, (batch,), 0, vocab_size, dtype=jnp.int32)
    v_neg = jax.random.randint(k_vn, (batch, n_neg), 0, vocab_size, dtype=jnp.int32)

    ref = _skipgram_loss_ref(u_weights, v_weights, u_pos, v_pos, v_neg)

    # Multi-tile path (3 tiles of 8 rows, 4 padded rows masked out).
    loss_tiled = jax.block_until_ready(
        skipgram_loss(u_weights, v_weights, u_pos, v_pos, v_neg, tb=8)
    )
    assert jnp.allclose(loss_tiled, ref, atol=1e-5, rtol=1e-5), (loss_tiled, ref)

    # Single-tile path (default tile covers the whole padded batch).
    loss_single = jax.block_until_ready(
        skipgram_loss(u_weights, v_weights, u_pos, v_pos, v_neg)
    )
    assert jnp.allclose(loss_single, ref, atol=1e-5, rtol=1e-5), (loss_single, ref)

    print("KERNEL_OK")
</pallas_src>

<mosaic_0001>
module attributes {stable_mosaic.version = 11 : i64} {
  func.func @kernel(%arg0: i32, %arg1: memref<8x128xf32, #tpu.memory_space<vmem>>, %arg2: memref<8x128xf32, #tpu.memory_space<vmem>>, %arg3: memref<8x128xf32, #tpu.memory_space<vmem>>, %arg4: memref<1x8x128xf32, #tpu.memory_space<vmem>>) attributes {dimension_semantics = [#tpu.dimension_semantics<parallel>], iteration_bounds = array<i64: 3>, scalar_prefetch = 0 : i64, scratch_operands = 0 : i64, tpu.core_type = #tpu.core_type<tc>, window_params = [{transform_indices = @transform_0, window_bounds = array<i64: 8, 128>}, {transform_indices = @transform_1, window_bounds = array<i64: 8, 128>}, {transform_indices = @transform_2, window_bounds = array<i64: 8, 128>}, {transform_indices = @transform_3, window_bounds = array<i64: 1, 8, 128>}]} {
    %c0 = arith.constant 0 : index
    %c0_0 = arith.constant 0 : index
    %0 = vector.load %arg1[%c0, %c0_0] : memref<8x128xf32, #tpu.memory_space<vmem>>, vector<8x128xf32>
    %c0_1 = arith.constant 0 : index
    %c0_2 = arith.constant 0 : index
    %1 = vector.load %arg2[%c0_1, %c0_2] : memref<8x128xf32, #tpu.memory_space<vmem>>, vector<8x128xf32>
    %c0_3 = arith.constant 0 : index
    %c0_4 = arith.constant 0 : index
    %2 = vector.load %arg3[%c0_3, %c0_4] : memref<8x128xf32, #tpu.memory_space<vmem>>, vector<8x128xf32>
    %3 = arith.mulf %0, %1 : vector<8x128xf32>
    %cst = arith.constant dense<0.000000e+00> : vector<8xf32>
    %4 = vector.multi_reduction <add>, %3, %cst [1] : vector<8x128xf32> to vector<8xf32>
    %5 = vector.shape_cast %4 : vector<8xf32> to vector<8x1xf32>
    %6 = arith.mulf %0, %2 : vector<8x128xf32>
    %cst_5 = arith.constant dense<0.000000e+00> : vector<8xf32>
    %7 = vector.multi_reduction <add>, %6, %cst_5 [1] : vector<8x128xf32> to vector<8xf32>
    %8 = vector.shape_cast %7 : vector<8xf32> to vector<8x1xf32>
    %cst_6 = arith.constant 0.000000e+00 : f32
    %9 = vector.broadcast %cst_6 : f32 to vector<8x1xf32>
    %10 = arith.minimumf %5, %9 : vector<8x1xf32>
    %11 = math.absf %5 : vector<8x1xf32>
    %cst_7 = arith.constant 0.000000e+00 : f32
    %12 = vector.broadcast %cst_7 : f32 to vector<8x1xf32>
    %13 = arith.subf %12, %11 : vector<8x1xf32>
    %14 = math.exp %13 : vector<8x1xf32>
    %15 = math.log1p %14 : vector<8x1xf32>
    %16 = arith.subf %10, %15 : vector<8x1xf32>
    %cst_8 = arith.constant 0.000000e+00 : f32
    %17 = vector.broadcast %cst_8 : f32 to vector<8x1xf32>
    %18 = arith.subf %17, %8 : vector<8x1xf32>
    %cst_9 = arith.constant 0.000000e+00 : f32
    %19 = vector.broadcast %cst_9 : f32 to vector<8x1xf32>
    %20 = arith.minimumf %18, %19 : vector<8x1xf32>
    %21 = math.absf %18 : vector<8x1xf32>
    %cst_10 = arith.constant 0.000000e+00 : f32
    %22 = vector.broadcast %cst_10 : f32 to vector<8x1xf32>
    %23 = arith.subf %22, %21 : vector<8x1xf32>
    %24 = math.exp %23 : vector<8x1xf32>
    %25 = math.log1p %24 : vector<8x1xf32>
    %26 = arith.subf %20, %25 : vector<8x1xf32>
    %27 = arith.addf %16, %26 : vector<8x1xf32>
    %c8_i32 = arith.constant 8 : i32
    %28 = arith.muli %arg0, %c8_i32 : i32
    %29 = tpu.iota {dimensions = array<i32: 0>} : vector<8x1xi32>
    %30 = vector.broadcast %28 : i32 to vector<8x1xi32>
    %31 = arith.addi %30, %29 : vector<8x1xi32>
    %c20_i32 = arith.constant 20 : i32
    %32 = vector.broadcast %c20_i32 : i32 to vector<8x1xi32>
    %33 = arith.cmpi slt, %31, %32 : vector<8x1xi32>
    %cst_11 = arith.constant 0.000000e+00 : f32
    %34 = vector.broadcast %cst_11 : f32 to vector<8x1xf32>
    %35 = arith.select %33, %27, %34 : vector<8x1xi1>, vector<8x1xf32>
    %36 = vector.shape_cast %35 : vector<8x1xf32> to vector<1x8x1xf32>
    %cst_12 = arith.constant dense<0.000000e+00> : vector<1xf32>
    %37 = vector.multi_reduction <add>, %36, %cst_12 [1, 2] : vector<1x8x1xf32> to vector<1xf32>
    %38 = vector.shape_cast %37 : vector<1xf32> to vector<1x1x1xf32>
    %39 = vector.extract %38[0, 0, 0] : f32 from vector<1x1x1xf32>
    %40 = vector.broadcast %39 : f32 to vector<1x8x128xf32>
    %c0_13 = arith.constant 0 : index
    %c0_14 = arith.constant 0 : index
    %c0_15 = arith.constant 0 : index
    %41 = vector.load %arg4[%c0_13, %c0_14, %c0_15] : memref<1x8x128xf32, #tpu.memory_space<vmem>>, vector<1x8x128xf32>
    tpu.vector_store %arg4[%c0_13, %c0_14, %c0_15], %40 {strides = array<i32>} : memref<1x8x128xf32, #tpu.memory_space<vmem>>, vector<1x8x128xf32>,
    return
  }
  func.func @transform_0(%arg0: i32) -> (i32, i32) {
    %c0_i32 = arith.constant 0 : i32
    %c0_i32_0 = arith.constant 0 : i32
    return %arg0, %c0_i32 : i32, i32
  }
  func.func @transform_1(%arg0: i32) -> (i32, i32) {
    %c0_i32 = arith.constant 0 : i32
    %c0_i32_0 = arith.constant 0 : i32
    return %arg0, %c0_i32 : i32, i32
  }
  func.func @transform_2(%arg0: i32) -> (i32, i32) {
    %c0_i32 = arith.constant 0 : i32
    %c0_i32_0 = arith.constant 0 : i32
    return %arg0, %c0_i32 : i32, i32
  }
  func.func @transform_3(%arg0: i32) -> (i32, i32, i32) {
    %c0_i32 = arith.constant 0 : i32
    %c0_i32_0 = arith.constant 0 : i32
    %c0_i32_1 = arith.constant 0 : i32
    return %arg0, %c0_i32, %c0_i32_0 : i32, i32, i32
  }
}

</mosaic_0001>

<llo_original>
// kernel: tpu_custom_call.1
$region0: #{tpu_custom_call.1}
  #allocation0 [shape = 'u32[]', space=smem, size = 0x4, offset = 0x4, fixed_abs, tag = 'smem constant byte address 0x4 - core index']
  #allocation1 [shape = 'u32[144,128]{1,0:T(1,128)}', space=vmem, size = 0x12000, scoped, tag = 'internal scratch']
  %s0 = inlined_call_operand.hbm [shape: f32[24,128], index: 0, kind: input, shape index: {}]
  %s1 = inlined_call_operand.hbm [shape: f32[24,128], index: 1, kind: input, shape index: {}]
  %s2 = inlined_call_operand.hbm [shape: f32[24,128], index: 2, kind: input, shape index: {}]
  %s3 = inlined_call_operand.hbm [shape: f32[3,8,128], index: 3, kind: output, shape index: {}]
  %s4 = sld [smem:[#allocation0]]
  $region57: #{tpu_custom_call.1} parent=0
    _
  %s6 = ssub.s32 1, %s4
  %s7 = scalar_select 0, %s6, %s4
  $region1: #{tpu_custom_call.1} parent=0
    #allocation2 [shape = 'u8[8192]{0}', space=vmem, size = 0x2000, scoped, tag = 'input window, operand 0']
    #allocation3 [shape = 's32[2]{0}', space=sflag, size = 0x8, scoped, tag = 'scoped memory for tpu_custom_call.1']
    #allocation4 [shape = 's32[2]{0}', space=sflag, size = 0x8, scoped, tag = 'scoped memory for tpu_custom_call.1']
    #allocation5 [shape = 'u8[8192]{0}', space=vmem, size = 0x2000, scoped, tag = 'input window, operand 1']
    #allocation6 [shape = 's32[2]{0}', space=sflag, size = 0x8, scoped, tag = 'scoped memory for tpu_custom_call.1']
    #allocation7 [shape = 'u8[8192]{0}', space=vmem, size = 0x2000, scoped, tag = 'input window, operand 2']
    #allocation8 [shape = 'u8[8192]{0}', space=vmem, size = 0x2000, scoped, tag = 'output window, operand 0']
    %8 = vsyncpa [#allocation3], 0
    %s9 = scalar_lea.sflag [#allocation3], 1
    %10 = vsyncpa %s9, 0
    %11 = vsyncpa [#allocation6], 0
    %s12 = scalar_lea.sflag [#allocation6], 1
    %13 = vsyncpa %s12, 0
    %14 = vsyncpa [#allocation4], 0
    %s15 = scalar_lea.sflag [#allocation4], 1
    %16 = vsyncpa %s15, 0
    loop: start=0, step=1, limit=5
    $region2: #{tpu_custom_call.1} parent=1 // loop_pre_header
      _
    $region3: #{tpu_custom_call.1} parent=1 // loop_header
      %s18 = sphi 0, %s22
      %p19 = scmp.ge.s32.totalorder %s18, 5
      %s28 = sphi 0, %s30
      %s31 = sphi 0, %s28
      %s32 = sphi 0, %s31
      %s48 = sphi 0, %s32
      %s54 = sphi 0, %s56
      %s57 = sphi 0, %s54
      %s58 = sphi 0, %s57
      %s74 = sphi 0, %s58
      %s80 = sphi 0, %s82
      %s83 = sphi 0, %s80
      %s84 = sphi 0, %s83
      %s100 = sphi 0, %s84
      %s106 = sphi 0, %s108
      %s109 = sphi 0, %s106
      %s110 = sphi 0, %s109
      %s126 = sphi 0, %s110
    $region4: #{tpu_custom_call.1} parent=1 // loop_header_branch
      %21 = sbr.rel (%p19) target = $region8
    $region5: #{tpu_custom_call.1} parent=1 // loop_body
      %s23 = ssub.s32 %s18, 1
      %s24 = ssub.s32 %s18, 2
      %s25 = sadd.s32 %s18, 1
      %s26 = ssub.s32 %s18, %s25
      %p27 = scmp.eq.s32.totalorder %s26, 0
      %s29 = sadd.s32 %s28, 1
      %s30 = scalar_select %p27, %s28, %s29
      %p33 = pneg %p27
      %p34 = scmp.eq.s32.totalorder %s18, 2
      %p35 = por %p33, %p34
      %p36 = scmp.ne.s32.totalorder %s28, %s31
      %p37 = scmp.eq.s32.totalorder %s18, 0
      %p38 = por %p36, %p37
      %p39 = scmp.ne.s32.totalorder %s28, %s31
      %p40 = scmp.eq.s32.totalorder %s23, 2
      %p41 = por %p39, %p40
      %p42 = scmp.ne.s32.totalorder %s31, %s32
      %p43 = scmp.eq.s32.totalorder %s23, 0
      %p44 = por %p42, %p43
      %p45 = scmp.ne.s32.totalorder %s31, %s32
      %p46 = scmp.eq.s32.totalorder %s24, 2
      %p47 = por %p45, %p46
      %p49 = scmp.ne.s32.totalorder %s32, %s48
      %p50 = scmp.eq.s32.totalorder %s24, 0
      %p51 = por %p49, %p50
      %s52 = ssub.s32 %s18, %s25
      %p53 = scmp.eq.s32.totalorder %s52, 0
      %s55 = sadd.s32 %s54, 1
      %s56 = scalar_select %p53, %s54, %s55
      %p59 = pneg %p53
      %p60 = scmp.eq.s32.totalorder %s18, 2
      %p61 = por %p59, %p60
      %p62 = scmp.ne.s32.totalorder %s54, %s57
      %p63 = scmp.eq.s32.totalorder %s18, 0
      %p64 = por %p62, %p63
      %p65 = scmp.ne.s32.totalorder %s54, %s57
      %p66 = scmp.eq.s32.totalorder %s23, 2
      %p67 = por %p65, %p66
      %p68 = scmp.ne.s32.totalorder %s57, %s58
      %p69 = scmp.eq.s32.totalorder %s23, 0
      %p70 = por %p68, %p69
      %p71 = scmp.ne.s32.totalorder %s57, %s58
      %p72 = scmp.eq.s32.totalorder %s24, 2
      %p73 = por %p71, %p72
      %p75 = scmp.ne.s32.totalorder %s58, %s74
      %p76 = scmp.eq.s32.totalorder %s24, 0
      %p77 = por %p75, %p76
      %s78 = ssub.s32 %s18, %s25
      %p79 = scmp.eq.s32.totalorder %s78, 0
      %s81 = sadd.s32 %s80, 1
      %s82 = scalar_select %p79, %s80, %s81
      %p85 = pneg %p79
      %p86 = scmp.eq.s32.totalorder %s18, 2
      %p87 = por %p85, %p86
      %p88 = scmp.ne.s32.totalorder %s80, %s83
      %p89 = scmp.eq.s32.totalorder %s18, 0
      %p90 = por %p88, %p89
      %p91 = scmp.ne.s32.totalorder %s80, %s83
      %p92 = scmp.eq.s32.totalorder %s23, 2
      %p93 = por %p91, %p92
      %p94 = scmp.ne.s32.totalorder %s83, %s84
      %p95 = scmp.eq.s32.totalorder %s23, 0
      %p96 = por %p94, %p95
      %p97 = scmp.ne.s32.totalorder %s83, %s84
      %p98 = scmp.eq.s32.totalorder %s24, 2
      %p99 = por %p97, %p98
      %p101 = scmp.ne.s32.totalorder %s84, %s100
      %p102 = scmp.eq.s32.totalorder %s24, 0
      %p103 = por %p101, %p102
      %s104 = ssub.s32 %s18, %s25
      %p105 = scmp.eq.s32.totalorder %s104, 0
      %s107 = sadd.s32 %s106, 1
      %s108 = scalar_select %p105, %s106, %s107
      %p111 = pneg %p105
      %p112 = scmp.eq.s32.totalorder %s18, 2
      %p113 = por %p111, %p112
      %p114 = scmp.ne.s32.totalorder %s106, %s109
      %p115 = scmp.eq.s32.totalorder %s18, 0
      %p116 = por %p114, %p115
      %p117 = scmp.ne.s32.totalorder %s106, %s109
      %p118 = scmp.eq.s32.totalorder %s23, 2
      %p119 = por %p117, %p118
      %p120 = scmp.ne.s32.totalorder %s109, %s110
      %p121 = scmp.eq.s32.totalorder %s23, 0
      %p122 = por %p120, %p121
      %p123 = scmp.ne.s32.totalorder %s109, %s110
      %p124 = scmp.eq.s32.totalorder %s24, 2
      %p125 = por %p123, %p124
      %p127 = scmp.ne.s32.totalorder %s110, %s126
      %p128 = scmp.eq.s32.totalorder %s24, 0
      %p129 = por %p127, %p128
      %p130 = scmp.le.s32.totalorder 1, %s18
      %p131 = scmp.lt.s32.totalorder %s18, 4
      %p132 = pnand %p130, %p131
      %p133 = pneg %p132
      // Predicated region
      $region9: #{tpu_custom_call.1} parent=5 // pred_check
        _
      $region10: #{tpu_custom_call.1} parent=5 // pred_check_branch
        %135 = sbr.rel (%p132) target = $region12
      $region11: #{tpu_custom_call.1} parent=5 // pred_region
        %s136 = ssub.s32 %s18, 1
      $region12: #{tpu_custom_call.1} parent=5 // pred_fallthru
        _
      %p137 = scmp.lt.s32.totalorder %s18, 3
      // Predicated region
      $region13: #{tpu_custom_call.1} parent=5 // pred_check
        %p138 = pneg %p137
      $region14: #{tpu_custom_call.1} parent=5 // pred_check_branch
        %140 = sbr.rel (%p138) target = $region16
      $region15: #{tpu_custom_call.1} parent=5 // pred_region
        // Predicated region
        $region17: #{tpu_custom_call.1} parent=15 // pred_check
          %p141 = pneg %p38
        $region18: #{tpu_custom_call.1} parent=15 // pred_check_branch
          %143 = sbr.rel (%p141) target = $region20
        $region19: #{tpu_custom_call.1} parent=15 // pred_region
          %s144 = sand.u32 %s28, 1
          %s145 = scalar_lea.sflag [#allocation3], %s144
          %s146 = sand.u32 %s28, 1
          %s147 = smul.addr %s146, 8
          %s148 = scalar_lea.vmem [#allocation2], %s147
          %s150 = ssub.s32 128, 128
          %151 = vsyncadd %s145, %s150
          %s152 = smul.addr %s18, 128
          %s153 = scalar_lea.hbm %s0, %s152
          %s155 = sshll.u32 %s148, 4
          %s156 = int_to_ptr.vmem [resolvable:$true] %s155
          %158 = dma.hbm_to_vmem [thread:$0]  %s153, 128, %s156, %s145
        $region20: #{tpu_custom_call.1} parent=15 // pred_fallthru
          _
        // Predicated region
        $region21: #{tpu_custom_call.1} parent=15 // pred_check
          %p159 = pneg %p64
        $region22: #{tpu_custom_call.1} parent=15 // pred_check_branch
          %161 = sbr.rel (%p159) target = $region24
        $region23: #{tpu_custom_call.1} parent=15 // pred_region
          %s162 = sand.u32 %s18, 1
          %s163 = scalar_lea.sflag [#allocation6], %s162
          %s164 = sand.u32 %s54, 1
          %s165 = smul.addr %s164, 8
          %s166 = scalar_lea.vmem [#allocation5], %s165
          %s168 = ssub.s32 128, 128
          %169 = vsyncadd %s163, %s168
          %s170 = smul.addr %s18, 128
          %s171 = scalar_lea.hbm %s1, %s170
          %s173 = sshll.u32 %s166, 4
          %s174 = int_to_ptr.vmem [resolvable:$true] %s173
          %176 = dma.hbm_to_vmem [thread:$0]  %s171, 128, %s174, %s163
        $region24: #{tpu_custom_call.1} parent=15 // pred_fallthru
          _
        // Predicated region
        $region25: #{tpu_custom_call.1} parent=15 // pred_check
          %p177 = pneg %p90
        $region26: #{tpu_custom_call.1} parent=15 // pred_check_branch
          %179 = sbr.rel (%p177) target = $region28
        $region27: #{tpu_custom_call.1} parent=15 // pred_region
          %s180 = sand.u32 %s18, 1
          %s181 = scalar_lea.sflag [#allocation6], %s180
          %s182 = sand.u32 %s80, 1
          %s183 = smul.addr %s182, 8
          %s184 = scalar_lea.vmem [#allocation7], %s183
          %s186 = ssub.s32 128, 128
          %187 = vsyncadd %s181, %s186
          %s188 = smul.addr %s18, 128
          %s189 = scalar_lea.hbm %s2, %s188
          %s191 = sshll.u32 %s184, 4
          %s192 = int_to_ptr.vmem [resolvable:$true] %s191
          %194 = dma.hbm_to_vmem [thread:$0]  %s189, 128, %s192, %s181
        $region28: #{tpu_custom_call.1} parent=15 // pred_fallthru
          _
      $region16: #{tpu_custom_call.1} parent=5 // pred_fallthru
        _
      %p195 = scmp.le.s32.totalorder 1, %s18
      %p196 = scmp.lt.s32.totalorder %s18, 4
      %p197 = pnand %p195, %p196
      %p198 = pneg %p197
      // Predicated region
      $region29: #{tpu_custom_call.1} parent=5 // pred_check
        _
      $region30: #{tpu_custom_call.1} parent=5 // pred_check_branch
        %200 = sbr.rel (%p197) target = $region32
      $region31: #{tpu_custom_call.1} parent=5 // pred_region
        %s201 = ssub.s32 %s18, 1
        %s202 = sand.u32 %s31, 1
        %s203 = scalar_lea.sflag [#allocation3], %s202
        %s204 = sand.u32 %s31, 1
        %s205 = smul.addr %s204, 8
        %s206 = scalar_lea.vmem [#allocation2], %s205
        // Predicated region
        $region33: #{tpu_custom_call.1} parent=31 // pred_check
          %p207 = pneg %p44
        $region34: #{tpu_custom_call.1} parent=31 // pred_check_branch
          %209 = sbr.rel (%p207) target = $region36
        $region35: #{tpu_custom_call.1} parent=31 // pred_region
          %210 = dma.done %s203, 128
        $region36: #{tpu_custom_call.1} parent=31 // pred_fallthru
          _
        %s211 = sand.u32 %s23, 1
        %s212 = scalar_lea.sflag [#allocation6], %s211
        %s213 = sand.u32 %s57, 1
        %s214 = smul.addr %s213, 8
        %s215 = scalar_lea.vmem [#allocation5], %s214
        // Predicated region
        $region37: #{tpu_custom_call.1} parent=31 // pred_check
          %p216 = pneg %p70
        $region38: #{tpu_custom_call.1} parent=31 // pred_check_branch
          %218 = sbr.rel (%p216) target = $region40
        $region39: #{tpu_custom_call.1} parent=31 // pred_region
          %219 = dma.done %s212, 128
        $region40: #{tpu_custom_call.1} parent=31 // pred_fallthru
          _
        %s220 = sand.u32 %s23, 1
        %s221 = scalar_lea.sflag [#allocation6], %s220
        %s222 = sand.u32 %s83, 1
        %s223 = smul.addr %s222, 8
        %s224 = scalar_lea.vmem [#allocation7], %s223
        // Predicated region
        $region41: #{tpu_custom_call.1} parent=31 // pred_check
          %p225 = pneg %p96
        $region42: #{tpu_custom_call.1} parent=31 // pred_check_branch
          %227 = sbr.rel (%p225) target = $region44
        $region43: #{tpu_custom_call.1} parent=31 // pred_region
          %228 = dma.done %s221, 128
        $region44: #{tpu_custom_call.1} parent=31 // pred_fallthru
          _
        %s229 = sand.u32 %s31, 1
        %s230 = scalar_lea.sflag [#allocation3], %s229
        %s231 = sand.u32 %s31, 1
        %s232 = smul.addr %s231, 8
        %s233 = scalar_lea.vmem [#allocation2], %s232
        %p234 = pneg %p44
        %p235 = pneg %p41
        %s236 = sand.u32 %s23, 1
        %s237 = scalar_lea.sflag [#allocation6], %s236
        %s238 = sand.u32 %s57, 1
        %s239 = smul.addr %s238, 8
        %s240 = scalar_lea.vmem [#allocation5], %s239
        %p241 = pneg %p70
        %p242 = pneg %p67
        %s243 = sand.u32 %s23, 1
        %s244 = scalar_lea.sflag [#allocation6], %s243
        %s245 = sand.u32 %s83, 1
        %s246 = smul.addr %s245, 8
        %s247 = scalar_lea.vmem [#allocation7], %s246
        %p248 = pneg %p96
        %p249 = pneg %p93
        %p250 = pneg %p122
        %p251 = pneg %p119
        %s252 = sand.u32 %s109, 1
        %s253 = scalar_lea.sflag [#allocation4], %s252
        %s254 = sand.u32 %s109, 1
        %s255 = smul.addr %s254, 8
        %s256 = scalar_lea.vmem [#allocation8], %s255
        %v257 = vld [vmem:[%s206] sm:$0xff]
        %v258 = vld [vmem:[%s215] sm:$0xff]
        %v259 = vld [vmem:[%s224] sm:$0xff]
        %v260 = vmul.f32 %v257, %v258
        %261 = vadd.xlane.f32.xlu0 %v260
        %v262 = vpop.xlane.xlu0 %261
        %v263 = vmul.f32 %v257, %v259
        %264 = vadd.xlane.f32.xlu0 %v263
        %v265 = vpop.xlane.xlu0 %264
        %v266 = vmin.f32 %v262, 0.0
        %v267 = vand.u32 2147483647, %v262
        %v268 = vsub.f32 0.0, %v267
        %v269 = vmul.f32 %v268, 1.442695
        %v270 = vpow.pop %v269
        %v271 = vadd.f32 %v270, 1.0
        %v272 = vlog2.pop %v271
        %v273 = vmul.f32 %v272, 0.6931472
        %v274 = vmul.f32 -0.5, %v270
        %v275 = vadd.f32 %v274, 1.0
        %v276 = vmul.f32 %v275, %v270
        %v277 = vand.u32 2147483647, %v270
        %vm278 = vcmp.lt.f32.partialorder %v277, 0.0004427343
        %v279 = vsel %vm278, %v276, %v273
        %v280 = vsub.f32 %v266, %v279
        %v281 = vsub.f32 0.0, %v265
        %v282 = vmin.f32 %v281, 0.0
        %v283 = vand.u32 2147483647, %v281
        %v284 = vsub.f32 0.0, %v283
        %v285 = vmul.f32 %v284, 1.442695
        %v286 = vpow.pop %v285
        %v287 = vadd.f32 %v286, 1.0
        %v288 = vlog2.pop %v287
        %v289 = vmul.f32 %v288, 0.6931472
        %v290 = vmul.f32 -0.5, %v286
        %v291 = vadd.f32 %v290, 1.0
        %v292 = vmul.f32 %v291, %v286
        %v293 = vand.u32 2147483647, %v286
        %vm294 = vcmp.lt.f32.partialorder %v293, 0.0004427343
        %v295 = vsel %vm294, %v292, %v289
        %v296 = vsub.f32 %v282, %v295
        %v297 = vadd.f32 %v280, %v296
        %s298 = smul.u32 %s23, 8
        %v299 = vlaneseq
        %v300 = vshrl.u32 %v299, 7
        %v301 = vstv %s298
        %v302 = vadd.s32 %v301, %v300
        %vm303 = vcmp.lt.s32.totalorder %v302, 20
        %v304 = vsel %vm303, %v297, 0.0
        %vm305 = vcmask 7168
        %v306 = vsel %vm305, %v304, 0.0
        %307 = vadd.xlane.f32.xlu0 %v306
        %v308 = vpop.xlane.xlu0 %307
        %v309 = vrot.slane %v308, 4
        %v310 = vadd.f32 %v308, %v309
        %v311 = vrot.slane %v310, 2
        %v312 = vadd.f32 %v310, %v311
        %v313 = vrot.slane %v312, 1
        %v314 = vadd.f32 %v312, %v313
        %s315 = vtos %v314
        %v316 = vstv %s315
        %317 = vst [vmem:[%s256] sm:$0xff] %v316
        %s318 = sand.u32 %s109, 1
        %s319 = scalar_lea.sflag [#allocation4], %s318
        %s320 = sand.u32 %s109, 1
        %s321 = smul.addr %s320, 8
        %s322 = scalar_lea.vmem [#allocation8], %s321
        // Predicated region
        $region45: #{tpu_custom_call.1} parent=31 // pred_check
          %p323 = pneg %p119
        $region46: #{tpu_custom_call.1} parent=31 // pred_check_branch
          %325 = sbr.rel (%p323) target = $region48
        $region47: #{tpu_custom_call.1} parent=31 // pred_region
          %s327 = ssub.s32 128, 128
          %328 = vsyncadd %s319, %s327
          %s329 = smul.addr %s23, 128
          %s330 = scalar_lea.hbm %s3, %s329
          %s332 = sshll.u32 %s322, 4
          %s333 = int_to_ptr.vmem [resolvable:$true] %s332
          %335 = dma.vmem_to_hbm [thread:$0]  %s333, 128, %s330, %s319
        $region48: #{tpu_custom_call.1} parent=31 // pred_fallthru
          _
      $region32: #{tpu_custom_call.1} parent=5 // pred_fallthru
        _
      %p336 = scmp.le.s32.totalorder 2, %s18
      // Predicated region
      $region49: #{tpu_custom_call.1} parent=5 // pred_check
        %p337 = pneg %p336
      $region50: #{tpu_custom_call.1} parent=5 // pred_check_branch
        %339 = sbr.rel (%p337) target = $region52
      $region51: #{tpu_custom_call.1} parent=5 // pred_region
        %s340 = ssub.s32 %s18, 2
        // Predicated region
        $region53: #{tpu_custom_call.1} parent=51 // pred_check
          %p341 = pneg %p125
        $region54: #{tpu_custom_call.1} parent=51 // pred_check_branch
          %343 = sbr.rel (%p341) target = $region56
        $region55: #{tpu_custom_call.1} parent=51 // pred_region
          %s344 = sand.u32 %s110, 1
          %s345 = scalar_lea.sflag [#allocation4], %s344
          %s346 = sand.u32 %s110, 1
          %s347 = smul.addr %s346, 8
          %s348 = scalar_lea.vmem [#allocation8], %s347
          %349 = dma.done %s345, 128
        $region56: #{tpu_custom_call.1} parent=51 // pred_fallthru
          _
      $region52: #{tpu_custom_call.1} parent=5 // pred_fallthru
        _
    $region6: #{tpu_custom_call.1} parent=1 // loop_footer
      %s22 = sadd.s32 1, %s18
    $region7: #{tpu_custom_call.1} parent=1 // loop_footer_branch
      %17 = sbr.rel target = $region3
    $region8: #{tpu_custom_call.1} parent=1 // loop_exit
      _
    %350 = vsyncpa [#allocation3], 1
    %s351 = scalar_lea.sflag [#allocation3], 1
    %352 = vsyncpa %s351, 1
    %353 = vsyncpa [#allocation6], 1
    %s354 = scalar_lea.sflag [#allocation6], 1
    %355 = vsyncpa %s354, 1
    %356 = vsyncpa [#allocation4], 1
    %s357 = scalar_lea.sflag [#allocation4], 1
    %358 = vsyncpa %s357, 1

</llo_original>
